<compile_context>
chip_gen: v5e
topology: v5e:2x2
jax: 0.10.0
libtpu: 0.0.40
codegen_flags: <defaults>
</compile_context>

<pallas_src>
import functools
import math

import jax
import jax.numpy as jnp
import numpy as np
from jax.experimental import pallas as pl
from jax.experimental.pallas import tpu as pltpu

HIGHEST = jax.lax.Precision.HIGHEST  # only used in the pure-JAX reference


# --------- kernel 1: LN + QKV proj + Q/K LN + rotary (one batch element per step) --------- #
def qkv_rope_kernel(x_ref, ln_w_ref, ln_b_ref, qln_w_ref, kln_w_ref, wqkv_ref,
                    cosq_ref, sinq_ref, cosk_ref, sink_ref,
                    q_ref, k_ref, v_ref, *, n_heads):
    x = x_ref[0]                        # (L, H) f32 block for one batch element
    H = x.shape[-1]
    d = H // n_heads
    d2 = d // 2
    eps = 1e-5                          # PyTorch LayerNorm default

    def layernorm(v, w, b=None):
        mu = jnp.mean(v, axis=-1, keepdims=True)
        var = jnp.mean((v - mu) ** 2, axis=-1, keepdims=True)
        y = (v - mu) * jax.lax.rsqrt(var + eps) * w
        return y + b if b is not None else y

    xn = layernorm(x, ln_w_ref[0], ln_b_ref[0]).astype(jnp.bfloat16)
    # bf16 operands on the MXU, f32 accumulation
    qkv = jnp.dot(xn, wqkv_ref[...], preferred_element_type=jnp.float32)   # (L, 3H) f32
    q = layernorm(qkv[:, 0 * H:1 * H], qln_w_ref[0])                       # q_ln (no bias)
    k = layernorm(qkv[:, 1 * H:2 * H], kln_w_ref[0])                       # k_ln (no bias)
    v = qkv[:, 2 * H:3 * H]

    # rotate_half on the flattened (L, H) layout: per head swap (t1, t2) -> (t2, t1);
    # the sign of rotate_half is folded into the signed sin tables.
    def swap_halves(t):
        parts = []
        for h in range(n_heads):
            parts.append(t[:, h * d + d2:(h + 1) * d])
            parts.append(t[:, h * d:h * d + d2])
        return jnp.concatenate(parts, axis=-1)

    # cos_q / sin_q already carry the 1/sqrt(d_head) SDPA scale (valid because both terms
    # of the rotary expression use q). Rotary math stays f32; stores are bf16 since they
    # feed bf16 MXU operands in kernel 2 anyway.
    q_ref[0] = (q * cosq_ref[...] + swap_halves(q) * sinq_ref[...]).astype(jnp.bfloat16)
    k_ref[0] = (k * cosk_ref[...] + swap_halves(k) * sink_ref[...]).astype(jnp.bfloat16)
    v_ref[0] = v.astype(jnp.bfloat16)


# --------- kernel 2: per-head attention + single fused out-projection (per batch) --------- #
def attn_kernel(q_ref, k_ref, v_ref, wo_ref, out_ref, a_scratch, *, n_heads, causal):
    _, L, H = q_ref.shape
    d = H // n_heads
    q = q_ref[0]                        # (L, H) bf16, rotary + 1/sqrt(d) already applied
    k = k_ref[0]
    v = v_ref[0]

    if causal:
        # In-kernel additive causal bias: two VPU ops instead of an (L,L) HBM array.
        # Finite -1e30 (no NaN risk: the diagonal is never masked).
        row = jax.lax.broadcasted_iota(jnp.int32, (L, L), 0)
        col = jax.lax.broadcasted_iota(jnp.int32, (L, L), 1)
        bias = jnp.where(col <= row, 0.0, -1e30).astype(jnp.float32)

    for h in range(n_heads):            # static unroll: all heads in one grid step
        sl = slice(h * d, (h + 1) * d)
        qh, kh, vh = q[:, sl], k[:, sl], v[:, sl]                        # (L, d) bf16
        # q @ k^T without materializing k^T: contract the d axis of both operands
        s = jax.lax.dot_general(qh, kh, (((1,), (1,)), ((), ())),
                                preferred_element_type=jnp.float32)      # (L, L) f32
        if causal:
            s = s + bias
        m = jnp.max(s, axis=-1, keepdims=True)
        e = jnp.exp(s - m)
        p = e * pl.reciprocal(jnp.sum(e, axis=-1, keepdims=True), approx=True)
        a = jnp.dot(p.astype(jnp.bfloat16), vh,
                    preferred_element_type=jnp.float32)                  # (L, d) f32
        a_scratch[:, sl] = a            # head concat via static column-slice stores

    # Single K=H out-projection with W_out resident (constant index_map): one MXU pass,
    # f32 accumulation, no per-head accumulation through the output block.
    out_ref[0] = jnp.dot(a_scratch[...].astype(jnp.bfloat16), wo_ref[...],
                         preferred_element_type=jnp.float32).astype(out_ref.dtype)


# ------------------------------------ host wrapper ---------------------------------------- #
def rotary_tables(L, d):
    inv_freq = 1.0 / (10000.0 ** (jnp.arange(0, d, 2, dtype=jnp.float32) / d))
    t = jnp.arange(L, dtype=jnp.float32)
    freqs = jnp.outer(t, inv_freq)                    # (L, d/2)
    emb = jnp.concatenate([freqs, freqs], axis=-1)    # (L, d)
    return jnp.cos(emb), jnp.sin(emb)


def _vmem_limit(est_bytes):
    # generous headroom, but keep below v7x's 64 MiB physical VMEM
    return int(min(48 * 2**20, max(32 * 2**20, 2 * est_bytes)))


def multi_head_attention(x, params, *, n_heads, causal=False):
    b, L, H = x.shape
    d = H // n_heads
    scale = 1.0 / math.sqrt(d)

    ln_w = params["ln_w"].reshape(1, H)
    ln_b = params["ln_b"].reshape(1, H)
    qln_w = params["q_ln_w"].reshape(1, H)
    kln_w = params["k_ln_w"].reshape(1, H)
    wqkv_t = params["w_qkv"].T.astype(jnp.bfloat16)       # (H, 3H) bf16
    wo_t = params["w_out"].T.astype(jnp.bfloat16)         # (H, H)  bf16

    # Rotary tables tiled to the flattened (L, H) layout. rotate_half's sign goes into the
    # sin tables; the SDPA 1/sqrt(d) scale goes into q's tables.
    cos, sin = rotary_tables(L, d)
    signs = jnp.concatenate([-jnp.ones((d // 2,), jnp.float32),
                             jnp.ones((d // 2,), jnp.float32)])
    cos_h = jnp.tile(cos, (1, n_heads))                   # (L, H)
    sin_h = jnp.tile(sin * signs, (1, n_heads))           # (L, H), signed
    cos_q, sin_q = cos_h * scale, sin_h * scale
    cos_k, sin_k = cos_h, sin_h

    # ---- kernel 1: LN + QKV projection + Q/K LN + rotary (grid over batch) ----
    # TODO(synk): tile L for very long sequences on v7x (LayerNorm is row-wise, tiles freely).
    est1 = (2 * (L * H * 4 + 4 * H * 4 + H * 3 * H * 2 + 4 * L * H * 4 + 3 * L * H * 2)
            + L * 3 * H * 4 + 4 * L * H * 4)
    q, k, v = pl.pallas_call(
        functools.partial(qkv_rope_kernel, n_heads=n_heads),
        out_shape=(jax.ShapeDtypeStruct((b, L, H), jnp.bfloat16),) * 3,
        grid=(b,),
        in_specs=[
            pl.BlockSpec((1, L, H), lambda i: (i, 0, 0)),     # x
            pl.BlockSpec((1, H), lambda i: (0, 0)),           # ln weight
            pl.BlockSpec((1, H), lambda i: (0, 0)),           # ln bias
            pl.BlockSpec((1, H), lambda i: (0, 0)),           # q_ln weight
            pl.BlockSpec((1, H), lambda i: (0, 0)),           # k_ln weight
            pl.BlockSpec((H, 3 * H), lambda i: (0, 0)),       # W_qkv^T (bf16, resident)
            pl.BlockSpec((L, H), lambda i: (0, 0)),           # cos_q (scaled)
            pl.BlockSpec((L, H), lambda i: (0, 0)),           # sin_q (signed, scaled)
            pl.BlockSpec((L, H), lambda i: (0, 0)),           # cos_k
            pl.BlockSpec((L, H), lambda i: (0, 0)),           # sin_k (signed)
        ],
        out_specs=(pl.BlockSpec((1, L, H), lambda i: (i, 0, 0)),) * 3,
        compiler_params=pltpu.CompilerParams(
            dimension_semantics=("parallel",),
            vmem_limit_bytes=_vmem_limit(est1)),
    )(x, ln_w, ln_b, qln_w, kln_w, wqkv_t, cos_q, sin_q, cos_k, sin_k)

    # ---- kernel 2: attention over all heads + single out-projection (grid over batch) ----
    # TODO(synk): flash-style online-softmax KV tiling for long sequences (v7x VMEM).
    est2 = (2 * (3 * L * H * 2 + H * H * 2 + L * H * 4)
            + L * H * 4 + 3 * L * L * 4 + L * H * 4)
    out = pl.pallas_call(
        functools.partial(attn_kernel, n_heads=n_heads, causal=causal),
        out_shape=jax.ShapeDtypeStruct((b, L, H), x.dtype),
        grid=(b,),
        in_specs=[
            pl.BlockSpec((1, L, H), lambda i: (i, 0, 0)),     # q (bf16, rotary applied)
            pl.BlockSpec((1, L, H), lambda i: (i, 0, 0)),     # k
            pl.BlockSpec((1, L, H), lambda i: (i, 0, 0)),     # v
            pl.BlockSpec((H, H), lambda i: (0, 0)),           # W_out^T (bf16, resident)
        ],
        out_specs=pl.BlockSpec((1, L, H), lambda i: (i, 0, 0)),
        scratch_shapes=[pltpu.VMEM((L, H), jnp.float32)],     # per-batch head-concat buffer
        compiler_params=pltpu.CompilerParams(
            dimension_semantics=("parallel",),
            vmem_limit_bytes=_vmem_limit(est2)),
    )(q, k, v, wo_t)
    return out


# --------------------------------- pure-JAX reference ------------------------------------- #
def reference(x, params, *, n_heads, causal=False):
    b, L, H = x.shape
    d = H // n_heads
    eps = 1e-5

    def ln(v, w, bias=None):
        mu = jnp.mean(v, -1, keepdims=True)
        var = jnp.mean((v - mu) ** 2, -1, keepdims=True)
        y = (v - mu) / jnp.sqrt(var + eps) * w
        return y if bias is None else y + bias

    xn = ln(x, params["ln_w"], params["ln_b"])
    qkv = jnp.einsum("blh,oh->blo", xn, params["w_qkv"], precision=HIGHEST)
    q, k, v = jnp.split(qkv, 3, axis=-1)
    q = ln(q, params["q_ln_w"])
    k = ln(k, params["k_ln_w"])

    cos, sin = rotary_tables(L, d)
    cos = cos[None, :, None, :]
    sin = sin[None, :, None, :]

    def rot_half(t):
        t1, t2 = jnp.split(t, 2, axis=-1)
        return jnp.concatenate([-t2, t1], axis=-1)

    q = q.reshape(b, L, n_heads, d)
    k = k.reshape(b, L, n_heads, d)
    v = v.reshape(b, L, n_heads, d)
    q = q * cos + rot_half(q) * sin
    k = k * cos + rot_half(k) * sin

    s = jnp.einsum("blhd,bmhd->bhlm", q, k, precision=HIGHEST) / math.sqrt(d)
    if causal:
        mask = jnp.tril(jnp.ones((L, L), bool))
        s = jnp.where(mask, s, -jnp.inf)
    p = jax.nn.softmax(s, axis=-1)
    a = jnp.einsum("bhlm,bmhd->blhd", p, v, precision=HIGHEST).reshape(b, L, H)
    return jnp.einsum("blh,oh->blo", a, params["w_out"], precision=HIGHEST)


# ---------------------------------------- main --------------------------------------------- #
if __name__ == "__main__":
    hidden, n_heads, batch, seq = 32, 4, 2, 8
    key = jax.random.PRNGKey(0)
    kx, kqkv, kout = jax.random.split(key, 3)

    x = jax.random.normal(kx, (batch, seq, hidden), dtype=jnp.float32)

    bound = 1.0 / math.sqrt(hidden)     # PyTorch Linear default init range
    params = {
        "ln_w": jnp.ones((hidden,), jnp.float32),
        "ln_b": jnp.zeros((hidden,), jnp.float32),
        "w_qkv": jax.random.uniform(kqkv, (3 * hidden, hidden), jnp.float32,
                                    -bound, bound),            # (out, in)
        "q_ln_w": jnp.ones((hidden,), jnp.float32),
        "k_ln_w": jnp.ones((hidden,), jnp.float32),
        "w_out": jax.random.uniform(kout, (hidden, hidden), jnp.float32,
                                    -bound, bound),            # (out, in)
    }

    for causal in (False, True):
        out = multi_head_attention(x, params, n_heads=n_heads, causal=causal)
        out = jax.block_until_ready(out)
        ref = reference(x, params, n_heads=n_heads, causal=causal)
        # bf16 MXU operands / bf16 q,k,v intermediates (f32 accumulation everywhere)
        # -> slightly looser tolerance than pure f32
        np.testing.assert_allclose(np.asarray(out), np.asarray(ref),
                                   rtol=2e-2, atol=2e-2)
    print("KERNEL_OK")
</pallas_src>

<mosaic_0001>
module attributes {stable_mosaic.version = 11 : i64} {
  func.func @qkv_rope_kernel(%arg0: i32, %arg1: memref<1x8x32xf32, #tpu.memory_space<vmem>>, %arg2: memref<1x32xf32, #tpu.memory_space<vmem>>, %arg3: memref<1x32xf32, #tpu.memory_space<vmem>>, %arg4: memref<1x32xf32, #tpu.memory_space<vmem>>, %arg5: memref<1x32xf32, #tpu.memory_space<vmem>>, %arg6: memref<32x96xbf16, #tpu.memory_space<vmem>>, %arg7: memref<8x32xf32, #tpu.memory_space<vmem>>, %arg8: memref<8x32xf32, #tpu.memory_space<vmem>>, %arg9: memref<8x32xf32, #tpu.memory_space<vmem>>, %arg10: memref<8x32xf32, #tpu.memory_space<vmem>>, %arg11: memref<1x8x32xbf16, #tpu.memory_space<vmem>>, %arg12: memref<1x8x32xbf16, #tpu.memory_space<vmem>>, %arg13: memref<1x8x32xbf16, #tpu.memory_space<vmem>>) attributes {dimension_semantics = [#tpu.dimension_semantics<parallel>], iteration_bounds = array<i64: 2>, scalar_prefetch = 0 : i64, scratch_operands = 0 : i64, tpu.core_type = #tpu.core_type<tc>, window_params = [{transform_indices = @transform_0, window_bounds = array<i64: 1, 8, 32>}, {pipeline_mode = #tpu.pipeline_mode<synchronous>, transform_indices = @transform_1, window_bounds = array<i64: 1, 32>}, {pipeline_mode = #tpu.pipeline_mode<synchronous>, transform_indices = @transform_2, window_bounds = array<i64: 1, 32>}, {pipeline_mode = #tpu.pipeline_mode<synchronous>, transform_indices = @transform_3, window_bounds = array<i64: 1, 32>}, {pipeline_mode = #tpu.pipeline_mode<synchronous>, transform_indices = @transform_4, window_bounds = array<i64: 1, 32>}, {pipeline_mode = #tpu.pipeline_mode<synchronous>, transform_indices = @transform_5, window_bounds = array<i64: 32, 96>}, {pipeline_mode = #tpu.pipeline_mode<synchronous>, transform_indices = @transform_6, window_bounds = array<i64: 8, 32>}, {pipeline_mode = #tpu.pipeline_mode<synchronous>, transform_indices = @transform_7, window_bounds = array<i64: 8, 32>}, {pipeline_mode = #tpu.pipeline_mode<synchronous>, transform_indices = @transform_8, window_bounds = array<i64: 8, 32>}, {pipeline_mode = #tpu.pipeline_mode<synchronous>, transform_indices = @transform_9, window_bounds = array<i64: 8, 32>}, {transform_indices = @transform_10, window_bounds = array<i64: 1, 8, 32>}, {transform_indices = @transform_11, window_bounds = array<i64: 1, 8, 32>}, {transform_indices = @transform_12, window_bounds = array<i64: 1, 8, 32>}]} {
    %c0 = arith.constant 0 : index
    %c0_0 = arith.constant 0 : index
    %c0_1 = arith.constant 0 : index
    %0 = vector.load %arg1[%c0, %c0_0, %c0_1] : memref<1x8x32xf32, #tpu.memory_space<vmem>>, vector<1x8x32xf32>
    %1 = vector.shape_cast %0 : vector<1x8x32xf32> to vector<8x32xf32>
    %c0_2 = arith.constant 0 : index
    %c0_3 = arith.constant 0 : index
    %2 = vector.load %arg2[%c0_2, %c0_3] : memref<1x32xf32, #tpu.memory_space<vmem>>, vector<1x32xf32>
    %3 = vector.shape_cast %2 : vector<1x32xf32> to vector<32xf32>
    %c0_4 = arith.constant 0 : index
    %c0_5 = arith.constant 0 : index
    %4 = vector.load %arg3[%c0_4, %c0_5] : memref<1x32xf32, #tpu.memory_space<vmem>>, vector<1x32xf32>
    %5 = vector.shape_cast %4 : vector<1x32xf32> to vector<32xf32>
    %cst = arith.constant dense<0.000000e+00> : vector<8xf32>
    %6 = vector.multi_reduction <add>, %1, %cst [1] : vector<8x32xf32> to vector<8xf32>
    %7 = vector.shape_cast %6 : vector<8xf32> to vector<8x1xf32>
    %cst_6 = arith.constant 3.200000e+01 : f32
    %8 = vector.broadcast %cst_6 : f32 to vector<8x1xf32>
    %9 = arith.divf %7, %8 : vector<8x1xf32>
    %10 = vector.broadcast %9 : vector<8x1xf32> to vector<8x32xf32>
    %11 = arith.subf %1, %10 : vector<8x32xf32>
    %12 = arith.mulf %11, %11 : vector<8x32xf32>
    %cst_7 = arith.constant dense<0.000000e+00> : vector<8xf32>
    %13 = vector.multi_reduction <add>, %12, %cst_7 [1] : vector<8x32xf32> to vector<8xf32>
    %14 = vector.shape_cast %13 : vector<8xf32> to vector<8x1xf32>
    %cst_8 = arith.constant 3.200000e+01 : f32
    %15 = vector.broadcast %cst_8 : f32 to vector<8x1xf32>
    %16 = arith.divf %14, %15 : vector<8x1xf32>
    %17 = vector.broadcast %9 : vector<8x1xf32> to vector<8x32xf32>
    %18 = arith.subf %1, %17 : vector<8x32xf32>
    %cst_9 = arith.constant 9.99999974E-6 : f32
    %19 = vector.broadcast %cst_9 : f32 to vector<8x1xf32>
    %20 = arith.addf %16, %19 : vector<8x1xf32>
    %21 = math.rsqrt %20 : vector<8x1xf32>
    %22 = vector.broadcast %21 : vector<8x1xf32> to vector<8x32xf32>
    %23 = arith.mulf %18, %22 : vector<8x32xf32>
    %24 = vector.shape_cast %3 : vector<32xf32> to vector<1x32xf32>
    %25 = vector.broadcast %24 : vector<1x32xf32> to vector<8x32xf32>
    %26 = arith.mulf %23, %25 : vector<8x32xf32>
    %27 = vector.shape_cast %5 : vector<32xf32> to vector<1x32xf32>
    %28 = vector.broadcast %27 : vector<1x32xf32> to vector<8x32xf32>
    %29 = arith.addf %26, %28 : vector<8x32xf32>
    %30 = arith.truncf %29 : vector<8x32xf32> to vector<8x32xbf16>
    %c0_10 = arith.constant 0 : index
    %c0_11 = arith.constant 0 : index
    %31 = vector.load %arg6[%c0_10, %c0_11] : memref<32x96xbf16, #tpu.memory_space<vmem>>, vector<32x96xbf16>
    %cst_12 = arith.constant dense<0.000000e+00> : vector<8x96xf32>
    %32 = tpu.matmul %30, %31, %cst_12 {dimension_numbers = #tpu.dot_dimension_numbers<[1], [0], [0], [1], [0, 0, 1, 1], [], []>} : vector<8x32xbf16>, vector<32x96xbf16>, vector<8x96xf32> -> vector<8x96xf32>
    %33 = vector.extract_strided_slice %32 {offsets = [0, 0], sizes = [8, 32], strides = [1, 1]} : vector<8x96xf32> to vector<8x32xf32>
    %c0_13 = arith.constant 0 : index
    %c0_14 = arith.constant 0 : index
    %34 = vector.load %arg4[%c0_13, %c0_14] : memref<1x32xf32, #tpu.memory_space<vmem>>, vector<1x32xf32>
    %35 = vector.shape_cast %34 : vector<1x32xf32> to vector<32xf32>
    %cst_15 = arith.constant dense<0.000000e+00> : vector<8xf32>
    %36 = vector.multi_reduction <add>, %33, %cst_15 [1] : vector<8x32xf32> to vector<8xf32>
    %37 = vector.shape_cast %36 : vector<8xf32> to vector<8x1xf32>
    %cst_16 = arith.constant 3.200000e+01 : f32
    %38 = vector.broadcast %cst_16 : f32 to vector<8x1xf32>
    %39 = arith.divf %37, %38 : vector<8x1xf32>
    %40 = vector.broadcast %39 : vector<8x1xf32> to vector<8x32xf32>
    %41 = arith.subf %33, %40 : vector<8x32xf32>
    %42 = arith.mulf %41, %41 : vector<8x32xf32>
    %cst_17 = arith.constant dense<0.000000e+00> : vector<8xf32>
    %43 = vector.multi_reduction <add>, %42, %cst_17 [1] : vector<8x32xf32> to vector<8xf32>
    %44 = vector.shape_cast %43 : vector<8xf32> to vector<8x1xf32>
    %cst_18 = arith.constant 3.200000e+01 : f32
    %45 = vector.broadcast %cst_18 : f32 to vector<8x1xf32>
    %46 = arith.divf %44, %45 : vector<8x1xf32>
    %47 = vector.broadcast %39 : vector<8x1xf32> to vector<8x32xf32>
    %48 = arith.subf %33, %47 : vector<8x32xf32>
    %cst_19 = arith.constant 9.99999974E-6 : f32
    %49 = vector.broadcast %cst_19 : f32 to vector<8x1xf32>
    %50 = arith.addf %46, %49 : vector<8x1xf32>
    %51 = math.rsqrt %50 : vector<8x1xf32>
    %52 = vector.broadcast %51 : vector<8x1xf32> to vector<8x32xf32>
    %53 = arith.mulf %48, %52 : vector<8x32xf32>
    %54 = vector.shape_cast %35 : vector<32xf32> to vector<1x32xf32>
    %55 = vector.broadcast %54 : vector<1x32xf32> to vector<8x32xf32>
    %56 = arith.mulf %53, %55 : vector<8x32xf32>
    %57 = vector.extract_strided_slice %32 {offsets = [0, 32], sizes = [8, 32], strides = [1, 1]} : vector<8x96xf32> to vector<8x32xf32>
    %c0_20 = arith.constant 0 : index
    %c0_21 = arith.constant 0 : index
    %58 = vector.load %arg5[%c0_20, %c0_21] : memref<1x32xf32, #tpu.memory_space<vmem>>, vector<1x32xf32>
    %59 = vector.shape_cast %58 : vector<1x32xf32> to vector<32xf32>
    %cst_22 = arith.constant dense<0.000000e+00> : vector<8xf32>
    %60 = vector.multi_reduction <add>, %57, %cst_22 [1] : vector<8x32xf32> to vector<8xf32>
    %61 = vector.shape_cast %60 : vector<8xf32> to vector<8x1xf32>
    %cst_23 = arith.constant 3.200000e+01 : f32
    %62 = vector.broadcast %cst_23 : f32 to vector<8x1xf32>
    %63 = arith.divf %61, %62 : vector<8x1xf32>
    %64 = vector.broadcast %63 : vector<8x1xf32> to vector<8x32xf32>
    %65 = arith.subf %57, %64 : vector<8x32xf32>
    %66 = arith.mulf %65, %65 : vector<8x32xf32>
    %cst_24 = arith.constant dense<0.000000e+00> : vector<8xf32>
    %67 = vector.multi_reduction <add>, %66, %cst_24 [1] : vector<8x32xf32> to vector<8xf32>
    %68 = vector.shape_cast %67 : vector<8xf32> to vector<8x1xf32>
    %cst_25 = arith.constant 3.200000e+01 : f32
    %69 = vector.broadcast %cst_25 : f32 to vector<8x1xf32>
    %70 = arith.divf %68, %69 : vector<8x1xf32>
    %71 = vector.broadcast %63 : vector<8x1xf32> to vector<8x32xf32>
    %72 = arith.subf %57, %71 : vector<8x32xf32>
    %cst_26 = arith.constant 9.99999974E-6 : f32
    %73 = vector.broadcast %cst_26 : f32 to vector<8x1xf32>
    %74 = arith.addf %70, %73 : vector<8x1xf32>
    %75 = math.rsqrt %74 : vector<8x1xf32>
    %76 = vector.broadcast %75 : vector<8x1xf32> to vector<8x32xf32>
    %77 = arith.mulf %72, %76 : vector<8x32xf32>
    %78 = vector.shape_cast %59 : vector<32xf32> to vector<1x32xf32>
    %79 = vector.broadcast %78 : vector<1x32xf32> to vector<8x32xf32>
    %80 = arith.mulf %77, %79 : vector<8x32xf32>
    %81 = vector.extract_strided_slice %32 {offsets = [0, 64], sizes = [8, 32], strides = [1, 1]} : vector<8x96xf32> to vector<8x32xf32>
    %c0_27 = arith.constant 0 : index
    %c0_28 = arith.constant 0 : index
    %82 = vector.load %arg7[%c0_27, %c0_28] : memref<8x32xf32, #tpu.memory_space<vmem>>, vector<8x32xf32>
    %83 = arith.mulf %56, %82 : vector<8x32xf32>
    %84 = vector.extract_strided_slice %56 {offsets = [0, 4], sizes = [8, 4], strides = [1, 1]} : vector<8x32xf32> to vector<8x4xf32>
    %85 = vector.extract_strided_slice %56 {offsets = [0, 0], sizes = [8, 4], strides = [1, 1]} : vector<8x32xf32> to vector<8x4xf32>
    %86 = vector.extract_strided_slice %56 {offsets = [0, 12], sizes = [8, 4], strides = [1, 1]} : vector<8x32xf32> to vector<8x4xf32>
    %87 = vector.extract_strided_slice %56 {offsets = [0, 8], sizes = [8, 4], strides = [1, 1]} : vector<8x32xf32> to vector<8x4xf32>
    %88 = vector.extract_strided_slice %56 {offsets = [0, 20], sizes = [8, 4], strides = [1, 1]} : vector<8x32xf32> to vector<8x4xf32>
    %89 = vector.extract_strided_slice %56 {offsets = [0, 16], sizes = [8, 4], strides = [1, 1]} : vector<8x32xf32> to vector<8x4xf32>
    %90 = vector.extract_strided_slice %56 {offsets = [0, 28], sizes = [8, 4], strides = [1, 1]} : vector<8x32xf32> to vector<8x4xf32>
    %91 = vector.extract_strided_slice %56 {offsets = [0, 24], sizes = [8, 4], strides = [1, 1]} : vector<8x32xf32> to vector<8x4xf32>
    %92 = tpu.concatenate %84, %85, %86, %87, %88, %89, %90, %91 in 1 : vector<8x4xf32>, vector<8x4xf32>, vector<8x4xf32>, vector<8x4xf32>, vector<8x4xf32>, vector<8x4xf32>, vector<8x4xf32>, vector<8x4xf32> -> vector<8x32xf32>
    %c0_29 = arith.constant 0 : index
    %c0_30 = arith.constant 0 : index
    %93 = vector.load %arg8[%c0_29, %c0_30] : memref<8x32xf32, #tpu.memory_space<vmem>>, vector<8x32xf32>
    %94 = arith.mulf %92, %93 : vector<8x32xf32>
    %95 = arith.addf %83, %94 : vector<8x32xf32>
    %96 = arith.truncf %95 : vector<8x32xf32> to vector<8x32xbf16>
    %c0_31 = arith.constant 0 : index
    %c0_32 = arith.constant 0 : index
    %c0_33 = arith.constant 0 : index
    %97 = vector.load %arg11[%c0_31, %c0_32, %c0_33] : memref<1x8x32xbf16, #tpu.memory_space<vmem>>, vector<1x8x32xbf16>
    %98 = vector.shape_cast %97 : vector<1x8x32xbf16> to vector<8x32xbf16>
    %99 = vector.shape_cast %96 : vector<8x32xbf16> to vector<1x8x32xbf16>
    tpu.vector_store %arg11[%c0_31, %c0_32, %c0_33], %99 {strides = array<i32>} : memref<1x8x32xbf16, #tpu.memory_space<vmem>>, vector<1x8x32xbf16>,
    %c0_34 = arith.constant 0 : index
    %c0_35 = arith.constant 0 : index
    %100 = vector.load %arg9[%c0_34, %c0_35] : memref<8x32xf32, #tpu.memory_space<vmem>>, vector<8x32xf32>
    %101 = arith.mulf %80, %100 : vector<8x32xf32>
    %102 = vector.extract_strided_slice %80 {offsets = [0, 4], sizes = [8, 4], strides = [1, 1]} : vector<8x32xf32> to vector<8x4xf32>
    %103 = vector.extract_strided_slice %80 {offsets = [0, 0], sizes = [8, 4], strides = [1, 1]} : vector<8x32xf32> to vector<8x4xf32>
    %104 = vector.extract_strided_slice %80 {offsets = [0, 12], sizes = [8, 4], strides = [1, 1]} : vector<8x32xf32> to vector<8x4xf32>
    %105 = vector.extract_strided_slice %80 {offsets = [0, 8], sizes = [8, 4], strides = [1, 1]} : vector<8x32xf32> to vector<8x4xf32>
    %106 = vector.extract_strided_slice %80 {offsets = [0, 20], sizes = [8, 4], strides = [1, 1]} : vector<8x32xf32> to vector<8x4xf32>
    %107 = vector.extract_strided_slice %80 {offsets = [0, 16], sizes = [8, 4], strides = [1, 1]} : vector<8x32xf32> to vector<8x4xf32>
    %108 = vector.extract_strided_slice %80 {offsets = [0, 28], sizes = [8, 4], strides = [1, 1]} : vector<8x32xf32> to vector<8x4xf32>
    %109 = vector.extract_strided_slice %80 {offsets = [0, 24], sizes = [8, 4], strides = [1, 1]} : vector<8x32xf32> to vector<8x4xf32>
    %110 = tpu.concatenate %102, %103, %104, %105, %106, %107, %108, %109 in 1 : vector<8x4xf32>, vector<8x4xf32>, vector<8x4xf32>, vector<8x4xf32>, vector<8x4xf32>, vector<8x4xf32>, vector<8x4xf32>, vector<8x4xf32> -> vector<8x32xf32>
    %c0_36 = arith.constant 0 : index
    %c0_37 = arith.constant 0 : index
    %111 = vector.load %arg10[%c0_36, %c0_37] : memref<8x32xf32, #tpu.memory_space<vmem>>, vector<8x32xf32>
    %112 = arith.mulf %110, %111 : vector<8x32xf32>
    %113 = arith.addf %101, %112 : vector<8x32xf32>
    %114 = arith.truncf %113 : vector<8x32xf32> to vector<8x32xbf16>
    %c0_38 = arith.constant 0 : index
    %c0_39 = arith.constant 0 : index
    %c0_40 = arith.constant 0 : index
    %115 = vector.load %arg12[%c0_38, %c0_39, %c0_40] : memref<1x8x32xbf16, #tpu.memory_space<vmem>>, vector<1x8x32xbf16>
    %116 = vector.shape_cast %115 : vector<1x8x32xbf16> to vector<8x32xbf16>
    %117 = vector.shape_cast %114 : vector<8x32xbf16> to vector<1x8x32xbf16>
    tpu.vector_store %arg12[%c0_38, %c0_39, %c0_40], %117 {strides = array<i32>} : memref<1x8x32xbf16, #tpu.memory_space<vmem>>, vector<1x8x32xbf16>,
    %118 = arith.truncf %81 : vector<8x32xf32> to vector<8x32xbf16>
    %c0_41 = arith.constant 0 : index
    %c0_42 = arith.constant 0 : index
    %c0_43 = arith.constant 0 : index
    %119 = vector.load %arg13[%c0_41, %c0_42, %c0_43] : memref<1x8x32xbf16, #tpu.memory_space<vmem>>, vector<1x8x32xbf16>
    %120 = vector.shape_cast %119 : vector<1x8x32xbf16> to vector<8x32xbf16>
    %121 = vector.shape_cast %118 : vector<8x32xbf16> to vector<1x8x32xbf16>
    tpu.vector_store %arg13[%c0_41, %c0_42, %c0_43], %121 {strides = array<i32>} : memref<1x8x32xbf16, #tpu.memory_space<vmem>>, vector<1x8x32xbf16>,
    return
  }
  func.func @transform_0(%arg0: i32) -> (i32, i32, i32) {
    %c0_i32 = arith.constant 0 : i32
    %c0_i32_0 = arith.constant 0 : i32
    %c0_i32_1 = arith.constant 0 : i32
    return %arg0, %c0_i32, %c0_i32_0 : i32, i32, i32
  }
  func.func @transform_1(%arg0: i32) -> (i32, i32) {
    %c0_i32 = arith.constant 0 : i32
    %c0_i32_0 = arith.constant 0 : i32
    %c0_i32_1 = arith.constant 0 : i32
    return %c0_i32, %c0_i32_0 : i32, i32
  }
  func.func @transform_2(%arg0: i32) -> (i32, i32) {
    %c0_i32 = arith.constant 0 : i32
    %c0_i32_0 = arith.constant 0 : i32
    %c0_i32_1 = arith.constant 0 : i32
    return %c0_i32, %c0_i32_0 : i32, i32
  }
  func.func @transform_3(%arg0: i32) -> (i32, i32) {
    %c0_i32 = arith.constant 0 : i32
    %c0_i32_0 = arith.constant 0 : i32
    %c0_i32_1 = arith.constant 0 : i32
    return %c0_i32, %c0_i32_0 : i32, i32
  }
  func.func @transform_4(%arg0: i32) -> (i32, i32) {
    %c0_i32 = arith.constant 0 : i32
    %c0_i32_0 = arith.constant 0 : i32
    %c0_i32_1 = arith.constant 0 : i32
    return %c0_i32, %c0_i32_0 : i32, i32
  }
  func.func @transform_5(%arg0: i32) -> (i32, i32) {
    %c0_i32 = arith.constant 0 : i32
    %c0_i32_0 = arith.constant 0 : i32
    %c0_i32_1 = arith.constant 0 : i32
    return %c0_i32, %c0_i32_0 : i32, i32
  }
  func.func @transform_6(%arg0: i32) -> (i32, i32) {
    %c0_i32 = arith.constant 0 : i32
    %c0_i32_0 = arith.constant 0 : i32
    %c0_i32_1 = arith.constant 0 : i32
    return %c0_i32, %c0_i32_0 : i32, i32
  }
  func.func @transform_7(%arg0: i32) -> (i32, i32) {
    %c0_i32 = arith.constant 0 : i32
    %c0_i32_0 = arith.constant 0 : i32
    %c0_i32_1 = arith.constant 0 : i32
    return %c0_i32, %c0_i32_0 : i32, i32
  }
  func.func @transform_8(%arg0: i32) -> (i32, i32) {
    %c0_i32 = arith.constant 0 : i32
    %c0_i32_0 = arith.constant 0 : i32
    %c0_i32_1 = arith.constant 0 : i32
    return %c0_i32, %c0_i32_0 : i32, i32
  }
  func.func @transform_9(%arg0: i32) -> (i32, i32) {
    %c0_i32 = arith.constant 0 : i32
    %c0_i32_0 = arith.constant 0 : i32
    %c0_i32_1 = arith.constant 0 : i32
    return %c0_i32, %c0_i32_0 : i32, i32
  }
  func.func @transform_10(%arg0: i32) -> (i32, i32, i32) {
    %c0_i32 = arith.constant 0 : i32
    %c0_i32_0 = arith.constant 0 : i32
    %c0_i32_1 = arith.constant 0 : i32
    return %arg0, %c0_i32, %c0_i32_0 : i32, i32, i32
  }
  func.func @transform_11(%arg0: i32) -> (i32, i32, i32) {
    %c0_i32 = arith.constant 0 : i32
    %c0_i32_0 = arith.constant 0 : i32
    %c0_i32_1 = arith.constant 0 : i32
    return %arg0, %c0_i32, %c0_i32_0 : i32, i32, i32
  }
  func.func @transform_12(%arg0: i32) -> (i32, i32, i32) {
    %c0_i32 = arith.constant 0 : i32
    %c0_i32_0 = arith.constant 0 : i32
    %c0_i32_1 = arith.constant 0 : i32
    return %arg0, %c0_i32, %c0_i32_0 : i32, i32, i32
  }
}

</mosaic_0001>

<llo_original>
// kernel: tpu_custom_call.1
$region0: #{tpu_custom_call.1}
  #allocation0 [shape = 'u32[]', space=smem, size = 0x4, offset = 0x4, fixed_abs, tag = 'smem constant byte address 0x4 - core index']
  #allocation1 [shape = 'u32[72,128]{1,0:T(1,128)}', space=vmem, size = 0x9000, scoped, tag = 'internal scratch']
  %s0 = inlined_call_operand.hbm [shape: f32[2,8,32], index: 0, kind: input, shape index: {}]
  %s1 = inlined_call_operand.hbm [shape: f32[1,32], index: 1, kind: input, shape index: {}]
  %s2 = inlined_call_operand.hbm [shape: f32[1,32], index: 2, kind: input, shape index: {}]
  %s3 = inlined_call_operand.hbm [shape: f32[1,32], index: 3, kind: input, shape index: {}]
  %s4 = inlined_call_operand.hbm [shape: f32[1,32], index: 4, kind: input, shape index: {}]
  %s5 = inlined_call_operand.hbm [shape: bf16[32,96], index: 5, kind: input, shape index: {}]
  %s6 = inlined_call_operand.hbm [shape: f32[8,32], index: 6, kind: input, shape index: {}]
  %s7 = inlined_call_operand.hbm [shape: f32[8,32], index: 7, kind: input, shape index: {}]
  %s8 = inlined_call_operand.hbm [shape: f32[8,32], index: 8, kind: input, shape index: {}]
  %s9 = inlined_call_operand.vmem [shape: f32[8,32], index: 9, kind: input, shape index: {}]
  %s10 = inlined_call_operand.hbm [shape: bf16[2,8,32], index: 10, kind: output, shape index: {0}]
  %s11 = inlined_call_operand.hbm [shape: bf16[2,8,32], index: 11, kind: output, shape index: {1}]
  %s12 = inlined_call_operand.hbm [shape: bf16[2,8,32], index: 12, kind: output, shape index: {2}]
  %13 = xla_tuple %s10, %s11, %s12
  %s14 = sld [smem:[#allocation0]]
  $region125: #{tpu_custom_call.1} parent=0
    _
  %s16 = ssub.s32 1, %s14
  %s17 = scalar_select 0, %s16, %s14
  $region1: #{tpu_custom_call.1} parent=0
    #allocation2 [shape = 'u8[8192]{0}', space=vmem, size = 0x2000, scoped, tag = 'input window, operand 0']
    #allocation3 [shape = 's32[2]{0}', space=sflag, size = 0x8, scoped, tag = 'scoped memory for tpu_custom_call.1']
    #allocation4 [shape = 's32[2]{0}', space=sflag, size = 0x8, scoped, tag = 'scoped memory for tpu_custom_call.1']
    #allocation5 [shape = 'u8[512]{0}', space=vmem, size = 0x400, scoped, tag = 'input window, operand 1, single buffered']
    #allocation6 [shape = 's32[1]{0}', space=sflag, size = 0x4, scoped, tag = 'scoped memory for tpu_custom_call.1']
    #allocation7 [shape = 'u8[512]{0}', space=vmem, size = 0x400, scoped, tag = 'input window, operand 2, single buffered']
    #allocation8 [shape = 'u8[512]{0}', space=vmem, size = 0x400, scoped, tag = 'input window, operand 3, single buffered']
    #allocation9 [shape = 's32[1]{0}', space=sflag, size = 0x4, scoped, tag = 'scoped memory for tpu_custom_call.1']
    #allocation10 [shape = 'u8[512]{0}', space=vmem, size = 0x400, scoped, tag = 'input window, operand 4, single buffered']
    #allocation11 [shape = 'u8[8192]{0}', space=vmem, size = 0x2000, scoped, tag = 'input window, operand 5, single buffered']
    #allocation12 [shape = 's32[1]{0}', space=sflag, size = 0x4, scoped, tag = 'scoped memory for tpu_custom_call.1']
    #allocation13 [shape = 'u8[4096]{0}', space=vmem, size = 0x1000, scoped, tag = 'input window, operand 6, single buffered']
    #allocation14 [shape = 'u8[4096]{0}', space=vmem, size = 0x1000, scoped, tag = 'input window, operand 7, single buffered']
    #allocation15 [shape = 's32[1]{0}', space=sflag, size = 0x4, scoped, tag = 'scoped memory for tpu_custom_call.1']
    #allocation16 [shape = 'u8[4096]{0}', space=vmem, size = 0x1000, scoped, tag = 'input window, operand 8, single buffered']
    #allocation17 [shape = 'u8[4096]{0}', space=vmem, size = 0x1000, scoped, tag = 'output window, operand 0']
    #allocation18 [shape = 'u8[4096]{0}', space=vmem, size = 0x1000, scoped, tag = 'output window, operand 1']
    #allocation19 [shape = 's32[2]{0}', space=sflag, size = 0x8, scoped, tag = 'scoped memory for tpu_custom_call.1']
    #allocation20 [shape = 'u8[4096]{0}', space=vmem, size = 0x1000, scoped, tag = 'output window, operand 2']
    %18 = vsyncpa [#allocation3], 0
    %s19 = scalar_lea.sflag [#allocation3], 1
    %20 = vsyncpa %s19, 0
    %21 = vsyncpa [#allocation6], 0
    %22 = vsyncpa [#allocation9], 0
    %23 = vsyncpa [#allocation12], 0
    %24 = vsyncpa [#allocation15], 0
    %25 = vsyncpa [#allocation4], 0
    %s26 = scalar_lea.sflag [#allocation4], 1
    %27 = vsyncpa %s26, 0
    %28 = vsyncpa [#allocation19], 0
    %s29 = scalar_lea.sflag [#allocation19], 1
    %30 = vsyncpa %s29, 0
    loop: start=0, step=1, limit=4
    $region2: #{tpu_custom_call.1} parent=1 // loop_pre_header
      _
    $region3: #{tpu_custom_call.1} parent=1 // loop_header
      %s32 = sphi 0, %s36
      %p33 = scmp.ge.s32.totalorder %s32, 4
      %s42 = sphi 0, %s44
      %s45 = sphi 0, %s42
      %s46 = sphi 0, %s45
      %s62 = sphi 0, %s46
      %s66 = sphi 0, %s66
      %s68 = sphi 0, %s66
      %s69 = sphi 0, %s68
      %s83 = sphi 0, %s69
      %s87 = sphi 0, %s87
      %s89 = sphi 0, %s87
      %s90 = sphi 0, %s89
      %s104 = sphi 0, %s90
      %s108 = sphi 0, %s108
      %s110 = sphi 0, %s108
      %s111 = sphi 0, %s110
      %s125 = sphi 0, %s111
      %s129 = sphi 0, %s129
      %s131 = sphi 0, %s129
      %s132 = sphi 0, %s131
      %s146 = sphi 0, %s132
      %s150 = sphi 0, %s150
      %s152 = sphi 0, %s150
      %s153 = sphi 0, %s152
      %s167 = sphi 0, %s153
      %s171 = sphi 0, %s171
      %s173 = sphi 0, %s171
      %s174 = sphi 0, %s173
      %s188 = sphi 0, %s174
      %s192 = sphi 0, %s192
      %s194 = sphi 0, %s192
      %s195 = sphi 0, %s194
      %s209 = sphi 0, %s195
      %s213 = sphi 0, %s213
      %s215 = sphi 0, %s213
      %s216 = sphi 0, %s215
      %s230 = sphi 0, %s216
      %s234 = sphi 0, %s234
      %s236 = sphi 0, %s234
      %s237 = sphi 0, %s236
      %s251 = sphi 0, %s237
      %s257 = sphi 0, %s259
      %s260 = sphi 0, %s257
      %s261 = sphi 0, %s260
      %s277 = sphi 0, %s261
      %s283 = sphi 0, %s285
      %s286 = sphi 0, %s283
      %s287 = sphi 0, %s286
      %s303 = sphi 0, %s287
      %s309 = sphi 0, %s311
      %s312 = sphi 0, %s309
      %s313 = sphi 0, %s312
      %s329 = sphi 0, %s313
    $region4: #{tpu_custom_call.1} parent=1 // loop_header_branch
      %35 = sbr.rel (%p33) target = $region8
    $region5: #{tpu_custom_call.1} parent=1 // loop_body
      %s37 = ssub.s32 %s32, 1
      %s38 = ssub.s32 %s32, 2
      %s39 = sadd.s32 %s32, 1
      %s40 = ssub.s32 %s32, %s39
      %p41 = scmp.eq.s32.totalorder %s40, 0
      %s43 = sadd.s32 %s42, 1
      %s44 = scalar_select %p41, %s42, %s43
      %p47 = pneg %p41
      %p48 = scmp.eq.s32.totalorder %s32, 1
      %p49 = por %p47, %p48
      %p50 = scmp.ne.s32.totalorder %s42, %s45
      %p51 = scmp.eq.s32.totalorder %s32, 0
      %p52 = por %p50, %p51
      %p53 = scmp.ne.s32.totalorder %s42, %s45
      %p54 = scmp.eq.s32.totalorder %s37, 1
      %p55 = por %p53, %p54
      %p56 = scmp.ne.s32.totalorder %s45, %s46
      %p57 = scmp.eq.s32.totalorder %s37, 0
      %p58 = por %p56, %p57
      %p59 = scmp.ne.s32.totalorder %s45, %s46
      %p60 = scmp.eq.s32.totalorder %s38, 1
      %p61 = por %p59, %p60
      %p63 = scmp.ne.s32.totalorder %s46, %s62
      %p64 = scmp.eq.s32.totalorder %s38, 0
      %p65 = por %p63, %p64
      %s67 = sadd.s32 %s66, 1
      %p70 = scmp.eq.s32.totalorder %s32, 1
      %p71 = scmp.ne.s32.totalorder %s66, %s68
      %p72 = scmp.eq.s32.totalorder %s32, 0
      %p73 = por %p71, %p72
      %p74 = scmp.ne.s32.totalorder %s66, %s68
      %p75 = scmp.eq.s32.totalorder %s37, 1
      %p76 = por %p74, %p75
      %p77 = scmp.ne.s32.totalorder %s68, %s69
      %p78 = scmp.eq.s32.totalorder %s37, 0
      %p79 = por %p77, %p78
      %p80 = scmp.ne.s32.totalorder %s68, %s69
      %p81 = scmp.eq.s32.totalorder %s38, 1
      %p82 = por %p80, %p81
      %p84 = scmp.ne.s32.totalorder %s69, %s83
      %p85 = scmp.eq.s32.totalorder %s38, 0
      %p86 = por %p84, %p85
      %s88 = sadd.s32 %s87, 1
      %p91 = scmp.eq.s32.totalorder %s32, 1
      %p92 = scmp.ne.s32.totalorder %s87, %s89
      %p93 = scmp.eq.s32.totalorder %s32, 0
      %p94 = por %p92, %p93
      %p95 = scmp.ne.s32.totalorder %s87, %s89
      %p96 = scmp.eq.s32.totalorder %s37, 1
      %p97 = por %p95, %p96
      %p98 = scmp.ne.s32.totalorder %s89, %s90
      %p99 = scmp.eq.s32.totalorder %s37, 0
      %p100 = por %p98, %p99
      %p101 = scmp.ne.s32.totalorder %s89, %s90
      %p102 = scmp.eq.s32.totalorder %s38, 1
      %p103 = por %p101, %p102
      %p105 = scmp.ne.s32.totalorder %s90, %s104
      %p106 = scmp.eq.s32.totalorder %s38, 0
      %p107 = por %p105, %p106
      %s109 = sadd.s32 %s108, 1
      %p112 = scmp.eq.s32.totalorder %s32, 1
      %p113 = scmp.ne.s32.totalorder %s108, %s110
      %p114 = scmp.eq.s32.totalorder %s32, 0
      %p115 = por %p113, %p114
      %p116 = scmp.ne.s32.totalorder %s108, %s110
      %p117 = scmp.eq.s32.totalorder %s37, 1
      %p118 = por %p116, %p117
      %p119 = scmp.ne.s32.totalorder %s110, %s111
      %p120 = scmp.eq.s32.totalorder %s37, 0
      %p121 = por %p119, %p120
      %p122 = scmp.ne.s32.totalorder %s110, %s111
      %p123 = scmp.eq.s32.totalorder %s38, 1
      %p124 = por %p122, %p123
      %p126 = scmp.ne.s32.totalorder %s111, %s125
      %p127 = scmp.eq.s32.totalorder %s38, 0
      %p128 = por %p126, %p127
      %s130 = sadd.s32 %s129, 1
      %p133 = scmp.eq.s32.totalorder %s32, 1
      %p134 = scmp.ne.s32.totalorder %s129, %s131
      %p135 = scmp.eq.s32.totalorder %s32, 0
      %p136 = por %p134, %p135
      %p137 = scmp.ne.s32.totalorder %s129, %s131
      %p138 = scmp.eq.s32.totalorder %s37, 1
      %p139 = por %p137, %p138
      %p140 = scmp.ne.s32.totalorder %s131, %s132
      %p141 = scmp.eq.s32.totalorder %s37, 0
      %p142 = por %p140, %p141
      %p143 = scmp.ne.s32.totalorder %s131, %s132
      %p144 = scmp.eq.s32.totalorder %s38, 1
      %p145 = por %p143, %p144
      %p147 = scmp.ne.s32.totalorder %s132, %s146
      %p148 = scmp.eq.s32.totalorder %s38, 0
      %p149 = por %p147, %p148
      %s151 = sadd.s32 %s150, 1
      %p154 = scmp.eq.s32.totalorder %s32, 1
      %p155 = scmp.ne.s32.totalorder %s150, %s152
      %p156 = scmp.eq.s32.totalorder %s32, 0
      %p157 = por %p155, %p156
      %p158 = scmp.ne.s32.totalorder %s150, %s152
      %p159 = scmp.eq.s32.totalorder %s37, 1
      %p160 = por %p158, %p159
      %p161 = scmp.ne.s32.totalorder %s152, %s153
      %p162 = scmp.eq.s32.totalorder %s37, 0
      %p163 = por %p161, %p162
      %p164 = scmp.ne.s32.totalorder %s152, %s153
      %p165 = scmp.eq.s32.totalorder %s38, 1
      %p166 = por %p164, %p165
      %p168 = scmp.ne.s32.totalorder %s153, %s167
      %p169 = scmp.eq.s32.totalorder %s38, 0
      %p170 = por %p168, %p169
      %s172 = sadd.s32 %s171, 1
      %p175 = scmp.eq.s32.totalorder %s32, 1
      %p176 = scmp.ne.s32.totalorder %s171, %s173
      %p177 = scmp.eq.s32.totalorder %s32, 0
      %p178 = por %p176, %p177
      %p179 = scmp.ne.s32.totalorder %s171, %s173
      %p180 = scmp.eq.s32.totalorder %s37, 1
      %p181 = por %p179, %p180
      %p182 = scmp.ne.s32.totalorder %s173, %s174
      %p183 = scmp.eq.s32.totalorder %s37, 0
      %p184 = por %p182, %p183
      %p185 = scmp.ne.s32.totalorder %s173, %s174
      %p186 = scmp.eq.s32.totalorder %s38, 1
      %p187 = por %p185, %p186
      %p189 = scmp.ne.s32.totalorder %s174, %s188
      %p190 = scmp.eq.s32.totalorder %s38, 0
      %p191 = por %p189, %p190
      %s193 = sadd.s32 %s192, 1
      %p196 = scmp.eq.s32.totalorder %s32, 1
      %p197 = scmp.ne.s32.totalorder %s192, %s194
      %p198 = scmp.eq.s32.totalorder %s32, 0
      %p199 = por %p197, %p198
      %p200 = scmp.ne.s32.totalorder %s192, %s194
      %p201 = scmp.eq.s32.totalorder %s37, 1
      %p202 = por %p200, %p201
      %p203 = scmp.ne.s32.totalorder %s194, %s195
      %p204 = scmp.eq.s32.totalorder %s37, 0
      %p205 = por %p203, %p204
      %p206 = scmp.ne.s32.totalorder %s194, %s195
      %p207 = scmp.eq.s32.totalorder %s38, 1
      %p208 = por %p206, %p207
      %p210 = scmp.ne.s32.totalorder %s195, %s209
      %p211 = scmp.eq.s32.totalorder %s38, 0
      %p212 = por %p210, %p211
      %s214 = sadd.s32 %s213, 1
      %p217 = scmp.eq.s32.totalorder %s32, 1
      %p218 = scmp.ne.s32.totalorder %s213, %s215
      %p219 = scmp.eq.s32.totalorder %s32, 0
      %p220 = por %p218, %p219
      %p221 = scmp.ne.s32.totalorder %s213, %s215
      %p222 = scmp.eq.s32.totalorder %s37, 1
      %p223 = por %p221, %p222
      %p224 = scmp.ne.s32.totalorder %s215, %s216
      %p225 = scmp.eq.s32.totalorder %s37, 0
      %p226 = por %p224, %p225
      %p227 = scmp.ne.s32.totalorder %s215, %s216
      %p228 = scmp.eq.s32.totalorder %s38, 1
      %p229 = por %p227, %p228
      %p231 = scmp.ne.s32.totalorder %s216, %s230
      %p232 = scmp.eq.s32.totalorder %s38, 0
      %p233 = por %p231, %p232
      %s235 = sadd.s32 %s234, 1
      %p238 = scmp.eq.s32.totalorder %s32, 1
      %p239 = scmp.ne.s32.totalorder %s234, %s236
      %p240 = scmp.eq.s32.totalorder %s32, 0
      %p241 = por %p239, %p240
      %p242 = scmp.ne.s32.totalorder %s234, %s236
      %p243 = scmp.eq.s32.totalorder %s37, 1
      %p244 = por %p242, %p243
      %p245 = scmp.ne.s32.totalorder %s236, %s237
      %p246 = scmp.eq.s32.totalorder %s37, 0
      %p247 = por %p245, %p246
      %p248 = scmp.ne.s32.totalorder %s236, %s237
      %p249 = scmp.eq.s32.totalorder %s38, 1
      %p250 = por %p248, %p249
      %p252 = scmp.ne.s32.totalorder %s237, %s251
      %p253 = scmp.eq.s32.totalorder %s38, 0
      %p254 = por %p252, %p253
      %s255 = ssub.s32 %s32, %s39
      %p256 = scmp.eq.s32.totalorder %s255, 0
      %s258 = sadd.s32 %s257, 1
      %s259 = scalar_select %p256, %s257, %s258
      %p262 = pneg %p256
      %p263 = scmp.eq.s32.totalorder %s32, 1
      %p264 = por %p262, %p263
      %p265 = scmp.ne.s32.totalorder %s257, %s260
      %p266 = scmp.eq.s32.totalorder %s32, 0
      %p267 = por %p265, %p266
      %p268 = scmp.ne.s32.totalorder %s257, %s260
      %p269 = scmp.eq.s32.totalorder %s37, 1
      %p270 = por %p268, %p269
      %p271 = scmp.ne.s32.totalorder %s260, %s261
      %p272 = scmp.eq.s32.totalorder %s37, 0
      %p273 = por %p271, %p272
      %p274 = scmp.ne.s32.totalorder %s260, %s261
      %p275 = scmp.eq.s32.totalorder %s38, 1
      %p276 = por %p274, %p275
      %p278 = scmp.ne.s32.totalorder %s261, %s277
      %p279 = scmp.eq.s32.totalorder %s38, 0
      %p280 = por %p278, %p279
      %s281 = ssub.s32 %s32, %s39
      %p282 = scmp.eq.s32.totalorder %s281, 0
      %s284 = sadd.s32 %s283, 1
      %s285 = scalar_select %p282, %s283, %s284
      %p288 = pneg %p282
      %p289 = scmp.eq.s32.totalorder %s32, 1
      %p290 = por %p288, %p289
      %p291 = scmp.ne.s32.totalorder %s283, %s286
      %p292 = scmp.eq.s32.totalorder %s32, 0
      %p293 = por %p291, %p292
      %p294 = scmp.ne.s32.totalorder %s283, %s286
      %p295 = scmp.eq.s32.totalorder %s37, 1
      %p296 = por %p294, %p295
      %p297 = scmp.ne.s32.totalorder %s286, %s287
      %p298 = scmp.eq.s32.totalorder %s37, 0
      %p299 = por %p297, %p298
      %p300 = scmp.ne.s32.totalorder %s286, %s287
      %p301 = scmp.eq.s32.totalorder %s38, 1
      %p302 = por %p300, %p301
      %p304 = scmp.ne.s32.totalorder %s287, %s303
      %p305 = scmp.eq.s32.totalorder %s38, 0
      %p306 = por %p304, %p305
      %s307 = ssub.s32 %s32, %s39
      %p308 = scmp.eq.s32.totalorder %s307, 0
      %s310 = sadd.s32 %s309, 1
      %s311 = scalar_select %p308, %s309, %s310
      %p314 = pneg %p308
      %p315 = scmp.eq.s32.totalorder %s32, 1
      %p316 = por %p314, %p315
      %p317 = scmp.ne.s32.totalorder %s309, %s312
      %p318 = scmp.eq.s32.totalorder %s32, 0
      %p319 = por %p317, %p318
      %p320 = scmp.ne.s32.totalorder %s309, %s312
      %p321 = scmp.eq.s32.totalorder %s37, 1
      %p322 = por %p320, %p321
      %p323 = scmp.ne.s32.totalorder %s312, %s313
      %p324 = scmp.eq.s32.totalorder %s37, 0
      %p325 = por %p323, %p324
      %p326 = scmp.ne.s32.totalorder %s312, %s313
      %p327 = scmp.eq.s32.totalorder %s38, 1
      %p328 = por %p326, %p327
      %p330 = scmp.ne.s32.totalorder %s313, %s329
      %p331 = scmp.eq.s32.totalorder %s38, 0
      %p332 = por %p330, %p331
      %p333 = scmp.le.s32.totalorder 1, %s32
      %p334 = scmp.lt.s32.totalorder %s32, 3
      %p335 = pnand %p333, %p334
      %p336 = pneg %p335
      // Predicated region
      $region9: #{tpu_custom_call.1} parent=5 // pred_check
        _
      $region10: #{tpu_custom_call.1} parent=5 // pred_check_branch
        %338 = sbr.rel (%p335) target = $region12
      $region11: #{tpu_custom_call.1} parent=5 // pred_region
        %s339 = ssub.s32 %s32, 1
        // Predicated region
        $region13: #{tpu_custom_call.1} parent=11 // pred_check
          %p340 = pneg %p79
        $region14: #{tpu_custom_call.1} parent=11 // pred_check_branch
          %342 = sbr.rel (%p340) target = $region16
        $region15: #{tpu_custom_call.1} parent=11 // pred_region
          %344 = vsyncadd [#allocation6], 0
          %s346 = sshll.u32 %s1, 4
          %s347 = int_to_ptr.hbm [resolvable:$true] %s346
          %s348 = sshll.u32 [#allocation5], 4
          %s349 = int_to_ptr.vmem [resolvable:$true] %s348
          %351 = dma.hbm_to_vmem [thread:$0]  %s347, 16, %s349, [#allocation6]
        $region16: #{tpu_custom_call.1} parent=11 // pred_fallthru
          _
        // Predicated region
        $region17: #{tpu_custom_call.1} parent=11 // pred_check
          %p352 = pneg %p100
        $region18: #{tpu_custom_call.1} parent=11 // pred_check_branch
          %354 = sbr.rel (%p352) target = $region20
        $region19: #{tpu_custom_call.1} parent=11 // pred_region
          %356 = vsyncadd [#allocation6], 0
          %s358 = sshll.u32 %s2, 4
          %s359 = int_to_ptr.hbm [resolvable:$true] %s358
          %s360 = sshll.u32 [#allocation7], 4
          %s361 = int_to_ptr.vmem [resolvable:$true] %s360
          %363 = dma.hbm_to_vmem [thread:$0]  %s359, 16, %s361, [#allocation6]
        $region20: #{tpu_custom_call.1} parent=11 // pred_fallthru
          _
        // Predicated region
        $region21: #{tpu_custom_call.1} parent=11 // pred_check
          %p364 = pneg %p121
        $region22: #{tpu_custom_call.1} parent=11 // pred_check_branch
          %366 = sbr.rel (%p364) target = $region24
        $region23: #{tpu_custom_call.1} parent=11 // pred_region
          %368 = vsyncadd [#allocation9], 0
          %s370 = sshll.u32 %s3, 4
          %s371 = int_to_ptr.hbm [resolvable:$true] %s370
          %s372 = sshll.u32 [#allocation8], 4
          %s373 = int_to_ptr.vmem [resolvable:$true] %s372
          %375 = dma.hbm_to_vmem [thread:$0]  %s371, 16, %s373, [#allocation9]
        $region24: #{tpu_custom_call.1} parent=11 // pred_fallthru
          _
        // Predicated region
        $region25: #{tpu_custom_call.1} parent=11 // pred_check
          %p376 = pneg %p142
        $region26: #{tpu_custom_call.1} parent=11 // pred_check_branch
          %378 = sbr.rel (%p376) target = $region28
        $region27: #{tpu_custom_call.1} parent=11 // pred_region
          %380 = vsyncadd [#allocation9], 0
          %s382 = sshll.u32 %s4, 4
          %s383 = int_to_ptr.hbm [resolvable:$true] %s382
          %s384 = sshll.u32 [#allocation10], 4
          %s385 = int_to_ptr.vmem [resolvable:$true] %s384
          %387 = dma.hbm_to_vmem [thread:$0]  %s383, 16, %s385, [#allocation9]
        $region28: #{tpu_custom_call.1} parent=11 // pred_fallthru
          _
        // Predicated region
        $region29: #{tpu_custom_call.1} parent=11 // pred_check
          %p388 = pneg %p163
        $region30: #{tpu_custom_call.1} parent=11 // pred_check_branch
          %390 = sbr.rel (%p388) target = $region32
        $region31: #{tpu_custom_call.1} parent=11 // pred_region
          %392 = vsyncadd [#allocation12], 0
          %s393 = sshll.u32 %s5, 4
          %s394 = int_to_ptr.hbm [resolvable:$true] %s393
          %s395 = sshll.u32 [#allocation11], 4
          %s396 = int_to_ptr.vmem [resolvable:$true] %s395
          %401 = dma.hbm_to_vmem [thread:$0]  %s394, 256, %s396, [#allocation12], 64, 64, 4
        $region32: #{tpu_custom_call.1} parent=11 // pred_fallthru
          _
        // Predicated region
        $region33: #{tpu_custom_call.1} parent=11 // pred_check
          %p402 = pneg %p184
        $region34: #{tpu_custom_call.1} parent=11 // pred_check_branch
          %404 = sbr.rel (%p402) target = $region36
        $region35: #{tpu_custom_call.1} parent=11 // pred_region
          %406 = vsyncadd [#allocation12], 0
          %s408 = sshll.u32 %s6, 4
          %s409 = int_to_ptr.hbm [resolvable:$true] %s408
          %s410 = sshll.u32 [#allocation13], 4
          %s411 = int_to_ptr.vmem [resolvable:$true] %s410
          %413 = dma.hbm_to_vmem [thread:$0]  %s409, 128, %s411, [#allocation12]
        $region36: #{tpu_custom_call.1} parent=11 // pred_fallthru
          _
        // Predicated region
        $region37: #{tpu_custom_call.1} parent=11 // pred_check
          %p414 = pneg %p205
        $region38: #{tpu_custom_call.1} parent=11 // pred_check_branch
          %416 = sbr.rel (%p414) target = $region40
        $region39: #{tpu_custom_call.1} parent=11 // pred_region
          %418 = vsyncadd [#allocation15], 0
          %s420 = sshll.u32 %s7, 4
          %s421 = int_to_ptr.hbm [resolvable:$true] %s420
          %s422 = sshll.u32 [#allocation14], 4
          %s423 = int_to_ptr.vmem [resolvable:$true] %s422
          %425 = dma.hbm_to_vmem [thread:$0]  %s421, 128, %s423, [#allocation15]
        $region40: #{tpu_custom_call.1} parent=11 // pred_fallthru
          _
        // Predicated region
        $region41: #{tpu_custom_call.1} parent=11 // pred_check
          %p426 = pneg %p226
        $region42: #{tpu_custom_call.1} parent=11 // pred_check_branch
          %428 = sbr.rel (%p426) target = $region44
        $region43: #{tpu_custom_call.1} parent=11 // pred_region
          %430 = vsyncadd [#allocation15], 0
          %s432 = sshll.u32 %s8, 4
          %s433 = int_to_ptr.hbm [resolvable:$true] %s432
          %s434 = sshll.u32 [#allocation16], 4
          %s435 = int_to_ptr.vmem [resolvable:$true] %s434
          %437 = dma.hbm_to_vmem [thread:$0]  %s433, 128, %s435, [#allocation15]
        $region44: #{tpu_custom_call.1} parent=11 // pred_fallthru
          _
        // Predicated region
        $region45: #{tpu_custom_call.1} parent=11 // pred_check
          %p438 = pneg %p247
        $region46: #{tpu_custom_call.1} parent=11 // pred_check_branch
          %440 = sbr.rel (%p438) target = $region48
        $region47: #{tpu_custom_call.1} parent=11 // pred_region
          _
        $region48: #{tpu_custom_call.1} parent=11 // pred_fallthru
          _
      $region12: #{tpu_custom_call.1} parent=5 // pred_fallthru
        _
      %p441 = scmp.lt.s32.totalorder %s32, 2
      // Predicated region
      $region49: #{tpu_custom_call.1} parent=5 // pred_check
        %p442 = pneg %p441
      $region50: #{tpu_custom_call.1} parent=5 // pred_check_branch
        %444 = sbr.rel (%p442) target = $region52
      $region51: #{tpu_custom_call.1} parent=5 // pred_region
        // Predicated region
        $region53: #{tpu_custom_call.1} parent=51 // pred_check
          %p445 = pneg %p52
        $region54: #{tpu_custom_call.1} parent=51 // pred_check_branch
          %447 = sbr.rel (%p445) target = $region56
        $region55: #{tpu_custom_call.1} parent=51 // pred_region
          %s448 = sand.u32 %s42, 1
          %s449 = scalar_lea.sflag [#allocation3], %s448
          %s450 = sand.u32 %s42, 1
          %s451 = smul.addr %s450, 8
          %s452 = scalar_lea.vmem [#allocation2], %s451
          %454 = vsyncadd %s449, 0
          %s455 = smul.addr %s32, 8
          %s456 = scalar_lea.hbm %s0, %s455
          %s458 = sshll.u32 %s456, 4
          %s459 = int_to_ptr.hbm [resolvable:$true] %s458
          %s460 = sshll.u32 %s452, 4
          %s461 = int_to_ptr.vmem [resolvable:$true] %s460
          %463 = dma.hbm_to_vmem [thread:$0]  %s459, 128, %s461, %s449
        $region56: #{tpu_custom_call.1} parent=51 // pred_fallthru
          _
      $region52: #{tpu_custom_call.1} parent=5 // pred_fallthru
        _
      %p464 = scmp.le.s32.totalorder 1, %s32
      %p465 = scmp.lt.s32.totalorder %s32, 3
      %p466 = pnand %p464, %p465
      %p467 = pneg %p466
      // Predicated region
      $region57: #{tpu_custom_call.1} parent=5 // pred_check
        _
      $region58: #{tpu_custom_call.1} parent=5 // pred_check_branch
        %469 = sbr.rel (%p466) target = $region60
      $region59: #{tpu_custom_call.1} parent=5 // pred_region
        %s470 = ssub.s32 %s32, 1
        %s471 = sand.u32 %s45, 1
        %s472 = scalar_lea.sflag [#allocation3], %s471
        %s473 = sand.u32 %s45, 1
        %s474 = smul.addr %s473, 8
        %s475 = scalar_lea.vmem [#allocation2], %s474
        // Predicated region
        $region61: #{tpu_custom_call.1} parent=59 // pred_check
          %p476 = pneg %p58
        $region62: #{tpu_custom_call.1} parent=59 // pred_check_branch
          %478 = sbr.rel (%p476) target = $region64
        $region63: #{tpu_custom_call.1} parent=59 // pred_region
          %480 = dma.done %s472, 128
        $region64: #{tpu_custom_call.1} parent=59 // pred_fallthru
          _
        // Predicated region
        $region65: #{tpu_custom_call.1} parent=59 // pred_check
          %p481 = pneg %p79
        $region66: #{tpu_custom_call.1} parent=59 // pred_check_branch
          %483 = sbr.rel (%p481) target = $region68
        $region67: #{tpu_custom_call.1} parent=59 // pred_region
          %485 = dma.done [#allocation6], 16
        $region68: #{tpu_custom_call.1} parent=59 // pred_fallthru
          _
        // Predicated region
        $region69: #{tpu_custom_call.1} parent=59 // pred_check
          %p486 = pneg %p100
        $region70: #{tpu_custom_call.1} parent=59 // pred_check_branch
          %488 = sbr.rel (%p486) target = $region72
        $region71: #{tpu_custom_call.1} parent=59 // pred_region
          %490 = dma.done [#allocation6], 16
        $region72: #{tpu_custom_call.1} parent=59 // pred_fallthru
          _
        // Predicated region
        $region73: #{tpu_custom_call.1} parent=59 // pred_check
          %p491 = pneg %p121
        $region74: #{tpu_custom_call.1} parent=59 // pred_check_branch
          %493 = sbr.rel (%p491) target = $region76
        $region75: #{tpu_custom_call.1} parent=59 // pred_region
          %495 = dma.done [#allocation9], 16
        $region76: #{tpu_custom_call.1} parent=59 // pred_fallthru
          _
        // Predicated region
        $region77: #{tpu_custom_call.1} parent=59 // pred_check
          %p496 = pneg %p142
        $region78: #{tpu_custom_call.1} parent=59 // pred_check_branch
          %498 = sbr.rel (%p496) target = $region80
        $region79: #{tpu_custom_call.1} parent=59 // pred_region
          %500 = dma.done [#allocation9], 16
        $region80: #{tpu_custom_call.1} parent=59 // pred_fallthru
          _
        // Predicated region
        $region81: #{tpu_custom_call.1} parent=59 // pred_check
          %p501 = pneg %p163
        $region82: #{tpu_custom_call.1} parent=59 // pred_check_branch
          %503 = sbr.rel (%p501) target = $region84
        $region83: #{tpu_custom_call.1} parent=59 // pred_region
          %505 = dma.done [#allocation12], 256
        $region84: #{tpu_custom_call.1} parent=59 // pred_fallthru
          _
        // Predicated region
        $region85: #{tpu_custom_call.1} parent=59 // pred_check
          %p506 = pneg %p184
        $region86: #{tpu_custom_call.1} parent=59 // pred_check_branch
          %508 = sbr.rel (%p506) target = $region88
        $region87: #{tpu_custom_call.1} parent=59 // pred_region
          %510 = dma.done [#allocation12], 128
        $region88: #{tpu_custom_call.1} parent=59 // pred_fallthru
          _
        // Predicated region
        $region89: #{tpu_custom_call.1} parent=59 // pred_check
          %p511 = pneg %p205
        $region90: #{tpu_custom_call.1} parent=59 // pred_check_branch
          %513 = sbr.rel (%p511) target = $region92
        $region91: #{tpu_custom_call.1} parent=59 // pred_region
          %515 = dma.done [#allocation15], 128
        $region92: #{tpu_custom_call.1} parent=59 // pred_fallthru
          _
        // Predicated region
        $region93: #{tpu_custom_call.1} parent=59 // pred_check
          %p516 = pneg %p226
        $region94: #{tpu_custom_call.1} parent=59 // pred_check_branch
          %518 = sbr.rel (%p516) target = $region96
        $region95: #{tpu_custom_call.1} parent=59 // pred_region
          %520 = dma.done [#allocation15], 128
        $region96: #{tpu_custom_call.1} parent=59 // pred_fallthru
          _
        %s521 = sand.u32 %s45, 1
        %s522 = scalar_lea.sflag [#allocation3], %s521
        %s523 = sand.u32 %s45, 1
        %s524 = smul.addr %s523, 8
        %s525 = scalar_lea.vmem [#allocation2], %s524
        %p526 = pneg %p58
        %p527 = pneg %p55
        %p528 = pneg %p79
        %p529 = pneg %p76
        %p530 = pneg %p100
        %p531 = pneg %p97
        %p532 = pneg %p121
        %p533 = pneg %p118
        %p534 = pneg %p142
        %p535 = pneg %p139
        %p536 = pneg %p163
        %p537 = pneg %p160
        %p538 = pneg %p184
        %p539 = pneg %p181
        %p540 = pneg %p205
        %p541 = pneg %p202
        %p542 = pneg %p226
        %p543 = pneg %p223
        %p544 = pneg %p247
        %p545 = pneg %p244
        %p546 = pneg %p273
        %p547 = pneg %p270
        %s548 = sand.u32 %s260, 1
        %s549 = scalar_lea.sflag [#allocation4], %s548
        %s550 = sand.u32 %s260, 1
        %s551 = smul.addr %s550, 4
        %s552 = scalar_lea.vmem [#allocation17], %s551
        %p553 = pneg %p299
        %p554 = pneg %p296
        %s555 = sand.u32 %s37, 1
        %s556 = scalar_lea.sflag [#allocation19], %s555
        %s557 = sand.u32 %s286, 1
        %s558 = smul.addr %s557, 4
        %s559 = scalar_lea.vmem [#allocation18], %s558
        %p560 = pneg %p325
        %p561 = pneg %p322
        %s562 = sand.u32 %s37, 1
        %s563 = scalar_lea.sflag [#allocation19], %s562
        %s564 = sand.u32 %s312, 1
        %s565 = smul.addr %s564, 4
        %s566 = scalar_lea.vmem [#allocation20], %s565
        %v568 = vld [vmem:[%s475] sm:$0xff]
        %v569 = vld [vmem:[#allocation5] sm:$0x1]
        %v570 = vld [vmem:[#allocation7] sm:$0x1]
        %vm571 = vcmask 261120
        %v572 = vsel %vm571, %v568, 0.0
        %573 = vadd.xlane.f32.xlu0 %v572
        %v574 = vpop.xlane.xlu0 %573
        %v575 = vrcp.pop 32.0
        %v576 = vmul.f32 32.0, %v575
        %v577 = vsub.f32 1.0, %v576
        %v578 = vmul.f32 %v575, %v577
        %v579 = vadd.f32 %v575, %v578
        %vm580 = vweird.f32 %v575
        %v581 = vsel %vm580, %v575, %v579
        %v582 = vmul.f32 %v574, %v581
        %v583 = vsub.f32 %v568, %v582
        %v584 = vmul.f32 %v583, %v583
        %v585 = vsel %vm571, %v584, 0.0
        %586 = vadd.xlane.f32.xlu0 %v585
        %v587 = vpop.xlane.xlu0 %586
        %v588 = vmul.f32 %v587, %v581
        %v589 = vadd.f32 %v588, 1e-05
        %v590 = vrsqrt.pop %v589
        %v591 = vmul.f32 %v590, %v589
        %v592 = vmul.f32 %v591, %v590
        %v593 = vmul.f32 0.5, %v592
        %v594 = vsub.f32 1.5, %v593
        %v595 = vmul.f32 %v590, %v594
        %vm596 = vweird.f32 %v589
        %vm597 = vweird.f32 %v590
        %vm598 = vmor %vm596, %vm597
        %v599 = vsel %vm598, %v590, %v595
        %v600 = vmul.f32 %v583, %v599
        %v602 = vperm.slane %v569, 0
        %v604 = vmul.f32 %v600, %v602
        %v606 = vperm.slane %v570, 0
        %v608 = vadd.f32 %v604, %v606
        %v609 = vpack.c.bf16 %v608, %v608
        %v610 = vld [vmem:[#allocation11] sm:$0xf]
        %v611 = vld [vmem:[#allocation11 + $0x4] sm:$0xf]
        %v612 = vld [vmem:[#allocation11 + $0x8] sm:$0xf]
        %v613 = vld [vmem:[#allocation11 + $0xc] sm:$0xf]
        %v618 = vunpack.c.l.b16 %v610
        %v619 = vunpack.c.l.b16 %v611
        %v620 = vunpack.c.l.b16 %v612
        %v621 = vunpack.c.l.b16 %v613
        %v622 = vpack.c.b16 %v619, %v618
        %v623 = vpack.c.b16 %v621, %v620
        %v627 = vsel %vm571, %v609, 0
        %629 = vmatpush.bf16.msra.mxu0 0
        %630 = vmatpush.bf16.msra.mxu0 0
        %631 = vmatpush.bf16.msra.mxu0 0
        %632 = vmatpush.bf16.msra.mxu0 0
        %633 = vmatpush.bf16.msra.mxu0 0
        %634 = vmatpush.bf16.msra.mxu0 0
        %635 = vmatpush.bf16.msra.mxu0 %v623
        %636 = vmatpush.bf16.msra.mxu0 %v622
        %637 = vmatmul.bf16.gmra.mxu0 %v627
        %v638 = vpop.f32.mrf.mxu0
        %v639 = vadd.f32 0.0, %v638
        %v640 = vpop.f32.mrf.mxu0
        %641 = vdwg.mxu0
        %v642 = vld [vmem:[#allocation8] sm:$0x1]
        %v643 = vsel %vm571, %v639, 0.0
        %644 = vadd.xlane.f32.xlu0 %v643
        %v645 = vpop.xlane.xlu0 %644
        %v646 = vmul.f32 %v645, %v581
        %v647 = vsub.f32 %v639, %v646
        %v648 = vmul.f32 %v647, %v647
        %v649 = vsel %vm571, %v648, 0.0
        %650 = vadd.xlane.f32.xlu0 %v649
        %v651 = vpop.xlane.xlu0 %650
        %v652 = vmul.f32 %v651, %v581
        %v653 = vadd.f32 %v652, 1e-05
        %v654 = vrsqrt.pop %v653
        %v655 = vmul.f32 %v654, %v653
        %v656 = vmul.f32 %v655, %v654
        %v657 = vmul.f32 0.5, %v656
        %v658 = vsub.f32 1.5, %v657
        %v659 = vmul.f32 %v654, %v658
        %vm660 = vweird.f32 %v653
        %vm661 = vweird.f32 %v654
        %vm662 = vmor %vm660, %vm661
        %v663 = vsel %vm662, %v654, %v659
        %v664 = vmul.f32 %v647, %v663
        %v666 = vperm.slane %v642, 0
        %v668 = vmul.f32 %v664, %v666
        %v669 = vld [vmem:[#allocation10] sm:$0x1]
        %671 = vrot.lane.b32.xlu0 %v639, 96
        %v672 = vpop.permute.xlu0 %671
        %v674 = vsel %vm571, %v672, 0.0
        %675 = vadd.xlane.f32.xlu0 %v674
        %v676 = vpop.xlane.xlu0 %675
        %v677 = vmul.f32 %v676, %v581
        %v678 = vsub.f32 %v639, %v677
        %v679 = vmul.f32 %v678, %v678
        %681 = vrot.lane.b32.xlu0 %v679, 96
        %v682 = vpop.permute.xlu0 %681
        %v684 = vsel %vm571, %v682, 0.0
        %685 = vadd.xlane.f32.xlu0 %v684
        %v686 = vpop.xlane.xlu0 %685
        %v687 = vmul.f32 %v686, %v581
        %v688 = vadd.f32 %v687, 1e-05
        %v689 = vrsqrt.pop %v688
        %v690 = vmul.f32 %v689, %v688
        %v691 = vmul.f32 %v690, %v689
        %v692 = vmul.f32 0.5, %v691
        %v693 = vsub.f32 1.5, %v692
        %v694 = vmul.f32 %v689, %v693
        %vm695 = vweird.f32 %v688
        %vm696 = vweird.f32 %v689
        %vm697 = vmor %vm695, %vm696
        %v698 = vsel %vm697, %v689, %v694
        %v699 = vmul.f32 %v678, %v698
        %v701 = vperm.slane %v669, 0
        %702 = vrot.lane.b32.xlu0 %v701, 32
        %v703 = vpop.permute.xlu0 %702
        %v705 = vmul.f32 %v699, %v703
        %v706 = vld [vmem:[#allocation13] sm:$0xff]
        %v707 = vmul.f32 %v668, %v706
        %709 = vrot.lane.b32.xlu0 %v668, 124
        %v710 = vpop.permute.xlu0 %709
        %712 = vrot.lane.b32.xlu0 %v668, 4
        %v713 = vpop.permute.xlu0 %712
        %vm715 = vcmask 31744
        %v716 = vsel %vm715, %v710, %v713
        %vm717 = vcmask 64512
        %v718 = vsel %vm717, %v716, %v710
        %vm719 = vcmask 97280
        %v720 = vsel %vm719, %v718, %v713
        %vm721 = vcmask 130048
        %v722 = vsel %vm721, %v720, %v710
        %vm723 = vcmask 162816
        %v724 = vsel %vm723, %v722, %v713
        %vm725 = vcmask 195584
        %v726 = vsel %vm725, %v724, %v710
        %vm727 = vcmask 228352
        %v728 = vsel %vm727, %v726, %v713
        %v729 = vld [vmem:[#allocation14] sm:$0xff]
        %v730 = vmul.f32 %v728, %v729
        %v731 = vadd.f32 %v707, %v730
        %v732 = vpack.c.bf16 %v731, %v731
        %vm733 = vcmask 257024
        %734 = vst.msk [vmem:[%s552] sm:$0xf] %vm733, %v732
        %v735 = vld [vmem:[#allocation16] sm:$0xff]
        %737 = vrot.lane.b32.xlu0 %v735, 32
        %v738 = vpop.permute.xlu0 %737
        %v740 = vmul.f32 %v705, %v738
        %742 = vrot.lane.b32.xlu0 %v705, 92
        %v743 = vpop.permute.xlu0 %742
        %745 = vrot.lane.b32.xlu0 %v705, 100
        %v746 = vpop.permute.xlu0 %745
        %v748 = vsel %vm715, %v743, %v746
        %v749 = vsel %vm717, %v748, %v743
        %v750 = vsel %vm719, %v749, %v746
        %v751 = vsel %vm721, %v750, %v743
        %v752 = vsel %vm723, %v751, %v746
        %v753 = vsel %vm725, %v752, %v743
        %v754 = vsel %vm727, %v753, %v746
        %v755 = vld [vmem:[%s9] sm:$0xff]
        %v756 = vmul.f32 %v754, %v755
        %758 = vrot.lane.b32.xlu0 %v756, 32
        %v759 = vpop.permute.xlu0 %758
        %v761 = vadd.f32 %v740, %v759
        %v762 = vpack.c.bf16 %v761, %v761
        %764 = vrot.lane.b32.xlu0 %v762, 96
        %v765 = vpop.permute.xlu0 %764
        %767 = vst.msk [vmem:[%s559] sm:$0xf] %vm733, %v765
        %v768 = vpack.c.bf16 %v639, %v639
        %770 = vrot.lane.b32.xlu0 %v768, 64
        %v771 = vpop.permute.xlu0 %770
        %773 = vst.msk [vmem:[%s566] sm:$0xf] %vm733, %v771
        %s774 = sand.u32 %s260, 1
        %s775 = scalar_lea.sflag [#allocation4], %s774
        %s776 = sand.u32 %s260, 1
        %s777 = smul.addr %s776, 4
        %s778 = scalar_lea.vmem [#allocation17], %s777
        %s779 = sand.u32 %s37, 1
        %s780 = scalar_lea.sflag [#allocation19], %s779
        %s781 = sand.u32 %s286, 1
        %s782 = smul.addr %s781, 4
        %s783 = scalar_lea.vmem [#allocation18], %s782
        %s784 = sand.u32 %s37, 1
        %s785 = scalar_lea.sflag [#allocation19], %s784
        %s786 = sand.u32 %s312, 1
        %s787 = smul.addr %s786, 4
        %s788 = scalar_lea.vmem [#allocation20], %s787
        // Predicated region
        $region97: #{tpu_custom_call.1} parent=59 // pred_check
          %p789 = pneg %p270
        $region98: #{tpu_custom_call.1} parent=59 // pred_check_branch
          %791 = sbr.rel (%p789) target = $region100
        $region99: #{tpu_custom_call.1} parent=59 // pred_region
          %793 = vsyncadd %s775, 0
          %s794 = smul.addr %s37, 4
          %s795 = scalar_lea.hbm %s10, %s794
          %s797 = sshll.u32 %s778, 4
          %s798 = int_to_ptr.vmem [resolvable:$true] %s797
          %s799 = sshll.u32 %s795, 4
          %s800 = int_to_ptr.hbm [resolvable:$true] %s799
          %802 = dma.vmem_to_hbm [thread:$0]  %s798, 64, %s800, %s775
        $region100: #{tpu_custom_call.1} parent=59 // pred_fallthru
          _
        // Predicated region
        $region101: #{tpu_custom_call.1} parent=59 // pred_check
          %p803 = pneg %p296
        $region102: #{tpu_custom_call.1} parent=59 // pred_check_branch
          %805 = sbr.rel (%p803) target = $region104
        $region103: #{tpu_custom_call.1} parent=59 // pred_region
          %807 = vsyncadd %s780, 0
          %s808 = smul.addr %s37, 4
          %s809 = scalar_lea.hbm %s11, %s808
          %s811 = sshll.u32 %s783, 4
          %s812 = int_to_ptr.vmem [resolvable:$true] %s811
          %s813 = sshll.u32 %s809, 4
          %s814 = int_to_ptr.hbm [resolvable:$true] %s813
          %816 = dma.vmem_to_hbm [thread:$0]  %s812, 64, %s814, %s780
        $region104: #{tpu_custom_call.1} parent=59 // pred_fallthru
          _
        // Predicated region
        $region105: #{tpu_custom_call.1} parent=59 // pred_check
          %p817 = pneg %p322
        $region106: #{tpu_custom_call.1} parent=59 // pred_check_branch
          %819 = sbr.rel (%p817) target = $region108
        $region107: #{tpu_custom_call.1} parent=59 // pred_region
          %821 = vsyncadd %s785, 0
          %s822 = smul.addr %s37, 4
          %s823 = scalar_lea.hbm %s12, %s822
          %s825 = sshll.u32 %s788, 4
          %s826 = int_to_ptr.vmem [resolvable:$true] %s825
          %s827 = sshll.u32 %s823, 4
          %s828 = int_to_ptr.hbm [resolvable:$true] %s827
          %830 = dma.vmem_to_hbm [thread:$0]  %s826, 64, %s828, %s785
        $region108: #{tpu_custom_call.1} parent=59 // pred_fallthru
          _
      $region60: #{tpu_custom_call.1} parent=5 // pred_fallthru
        _
      %p831 = scmp.le.s32.totalorder 2, %s32
      // Predicated region
      $region109: #{tpu_custom_call.1} parent=5 // pred_check
        %p832 = pneg %p831
      $region110: #{tpu_custom_call.1} parent=5 // pred_check_branch
        %834 = sbr.rel (%p832) target = $region112
      $region111: #{tpu_custom_call.1} parent=5 // pred_region
        %s835 = ssub.s32 %s32, 2
        // Predicated region
        $region113: #{tpu_custom_call.1} parent=111 // pred_check
          %p836 = pneg %p276
        $region114: #{tpu_custom_call.1} parent=111 // pred_check_branch
          %838 = sbr.rel (%p836) target = $region116
        $region115: #{tpu_custom_call.1} parent=111 // pred_region
          %s839 = sand.u32 %s261, 1
          %s840 = scalar_lea.sflag [#allocation4], %s839
          %s841 = sand.u32 %s261, 1
          %s842 = smul.addr %s841, 4
          %s843 = scalar_lea.vmem [#allocation17], %s842
          %845 = dma.done %s840, 64
        $region116: #{tpu_custom_call.1} parent=111 // pred_fallthru
          _
        // Predicated region
        $region117: #{tpu_custom_call.1} parent=111 // pred_check
          %p846 = pneg %p302
        $region118: #{tpu_custom_call.1} parent=111 // pred_check_branch
          %848 = sbr.rel (%p846) target = $region120
        $region119: #{tpu_custom_call.1} parent=111 // pred_region
          %s849 = sand.u32 %s38, 1
          %s850 = scalar_lea.sflag [#allocation19], %s849
          %s851 = sand.u32 %s287, 1
          %s852 = smul.addr %s851, 4
          %s853 = scalar_lea.vmem [#allocation18], %s852
          %855 = dma.done %s850, 64
        $region120: #{tpu_custom_call.1} parent=111 // pred_fallthru
          _
        // Predicated region
        $region121: #{tpu_custom_call.1} parent=111 // pred_check
          %p856 = pneg %p328
        $region122: #{tpu_custom_call.1} parent=111 // pred_check_branch
          %858 = sbr.rel (%p856) target = $region124
        $region123: #{tpu_custom_call.1} parent=111 // pred_region
          %s859 = sand.u32 %s38, 1
          %s860 = scalar_lea.sflag [#allocation19], %s859
          %s861 = sand.u32 %s313, 1
          %s862 = smul.addr %s861, 4
          %s863 = scalar_lea.vmem [#allocation20], %s862
          %865 = dma.done %s860, 64
        $region124: #{tpu_custom_call.1} parent=111 // pred_fallthru
          _
      $region112: #{tpu_custom_call.1} parent=5 // pred_fallthru
        _
    $region6: #{tpu_custom_call.1} parent=1 // loop_footer
      %s36 = sadd.s32 1, %s32
    $region7: #{tpu_custom_call.1} parent=1 // loop_footer_branch
      %31 = sbr.rel target = $region3
    $region8: #{tpu_custom_call.1} parent=1 // loop_exit
      _
    %866 = vsyncpa [#allocation3], 1
    %s867 = scalar_lea.sflag [#allocation3], 1
    %868 = vsyncpa %s867, 1
    %869 = vsyncpa [#allocation6], 1
    %870 = vsyncpa [#allocation9], 1
    %871 = vsyncpa [#allocation12], 1
    %872 = vsyncpa [#allocation15], 1
    %873 = vsyncpa [#allocation4], 1
    %s874 = scalar_lea.sflag [#allocation4], 1
    %875 = vsyncpa %s874, 1
    %876 = vsyncpa [#allocation19], 1
    %s877 = scalar_lea.sflag [#allocation19], 1
    %878 = vsyncpa %s877, 1

</llo_original>
